<compile_context>
chip_gen: v7x
topology: tpu7x:2x2x1
jax: 0.10.0
libtpu: 0.0.40
codegen_flags: <defaults>
</compile_context>

<pallas_src>
import functools

import jax
import jax.numpy as jnp
from jax.experimental import pallas as pl
from jax.experimental.pallas import tpu as pltpu

_EPS = 1e-5  # PyTorch LayerNorm default


def _patch_merge_kernel(c0_ref, c1_ref, w0_ref, w1_ref, b_ref, o_ref):
    # c0_ref / c1_ref: (TR, W2, 2*dim) even-row / odd-row halves of the merged
    # tokens, i.e. channel order [x0 | x2] and [x1 | x3] respectively.
    tr, w2, c = c0_ref.shape
    n = tr * w2

    x0 = c0_ref[...].reshape(n, c).astype(jnp.float32)
    x1 = c1_ref[...].reshape(n, c).astype(jnp.float32)

    # LayerNorm statistics over the full 4*dim channels (= both chunks).
    inv_d4 = 1.0 / (2 * c)
    mean = (jnp.sum(x0, axis=-1, keepdims=True)
            + jnp.sum(x1, axis=-1, keepdims=True)) * inv_d4
    d0 = x0 - mean
    d1 = x1 - mean
    var = (jnp.sum(d0 * d0, axis=-1, keepdims=True)
           + jnp.sum(d1 * d1, axis=-1, keepdims=True)) * inv_d4
    rstd = jax.lax.rsqrt(var + _EPS)

    # Matmuls in the weight dtype (bf16 stays bf16), f32 accumulation on MXU.
    mm_dtype = w0_ref.dtype
    xn0 = (d0 * rstd).astype(mm_dtype)
    xn1 = (d1 * rstd).astype(mm_dtype)

    y = jnp.dot(xn0, w0_ref[...], preferred_element_type=jnp.float32)
    y = y + jnp.dot(xn1, w1_ref[...], preferred_element_type=jnp.float32)
    y = y + b_ref[...]                      # (1, d2p) f32, broadcasts over rows

    o_ref[...] = y.reshape(tr, w2, -1).astype(o_ref.dtype)


def _pick_row_tile(R, W2, c, d2p, in_itemsize, target_tokens, vmem_budget_bytes):
    """Rows-of-merged-tokens per grid step, sized from a VMEM budget."""
    per_token = (2 * c * in_itemsize * 2      # both input chunks, double-buffered
                 + d2p * in_itemsize * 2      # output tile, double-buffered
                 + (6 * c + 2 * d2p) * 4)     # f32 temporaries (worst case)
    max_tokens = max(W2, vmem_budget_bytes // per_token)
    tokens = min(target_tokens, max_tokens)
    tr = max(1, tokens // W2)
    return min(tr, R)


def patch_merging(x, input_shape, gamma, beta, w, bias, *,
                  target_tokens=1024, vmem_budget_bytes=16 * 1024 * 1024):
    """x: (b, h*w, dim) -> (b, (h/2)*(w/2), 2*dim)."""
    h, w_sp = input_shape
    b, length, dim = x.shape
    assert length == h * w_sp, "the length of sequence is not equal to h * w"
    assert h % 2 == 0 and w_sp % 2 == 0, "h or w not even, cannot do PatchMerging"

    H2, W2 = h // 2, w_sp // 2
    d4, d2 = 4 * dim, 2 * dim
    c = 2 * dim                  # channels per row-parity chunk
    R = b * H2                   # number of (batch, merged-row) groups

    # --- free, contiguous reshape; axis 1 = image-row parity ----------------
    #   x4[r, 0, wc, :] = [x0 | x2]      x4[r, 1, wc, :] = [x1 | x3]
    x4 = x.reshape(R, 2, W2, c)

    # --- fold LN affine into the projection & permute rows to kernel order --
    gamma_f = gamma.reshape(d4).astype(jnp.float32)
    beta_f = beta.reshape(d4).astype(jnp.float32)
    w_f = w.astype(jnp.float32)
    w_eff = gamma_f[:, None] * w_f                                # (d4, d2)
    b_eff = beta_f @ w_f + bias.reshape(d2).astype(jnp.float32)   # (d2,)
    w0 = jnp.concatenate([w_eff[0:dim], w_eff[2 * dim:3 * dim]], axis=0)  # [x0;x2]
    w1 = jnp.concatenate([w_eff[dim:2 * dim], w_eff[3 * dim:]], axis=0)   # [x1;x3]

    # --- pad output channels to a lane-dense multiple of 128 ----------------
    d2p = ((d2 + 127) // 128) * 128
    if d2p != d2:
        pad = ((0, 0), (0, d2p - d2))
        w0 = jnp.pad(w0, pad)
        w1 = jnp.pad(w1, pad)
        b_eff = jnp.pad(b_eff, (0, d2p - d2))
    mm_dtype = x.dtype
    w0 = w0.astype(mm_dtype)
    w1 = w1.astype(mm_dtype)
    b_eff = b_eff.reshape(1, d2p)            # kept in f32 for the final add

    # --- row tile: as many merged-row groups per step as the budget allows --
    tr = _pick_row_tile(R, W2, c, d2p, x.dtype.itemsize,
                        target_tokens, vmem_budget_bytes)
    grid = (pl.cdiv(R, tr),)

    out = pl.pallas_call(
        _patch_merge_kernel,
        out_shape=jax.ShapeDtypeStruct((R, W2, d2p), x.dtype),
        grid=grid,
        in_specs=[
            pl.BlockSpec((tr, None, W2, c), lambda i: (i, 0, 0, 0)),  # even rows
            pl.BlockSpec((tr, None, W2, c), lambda i: (i, 1, 0, 0)),  # odd rows
            pl.BlockSpec((c, d2p), lambda i: (0, 0)),                 # w0 (resident)
            pl.BlockSpec((c, d2p), lambda i: (0, 0)),                 # w1 (resident)
            pl.BlockSpec((1, d2p), lambda i: (0, 0)),                 # fused bias
        ],
        out_specs=pl.BlockSpec((tr, W2, d2p), lambda i: (i, 0, 0)),
        compiler_params=pltpu.CompilerParams(
            dimension_semantics=("parallel",)),
    )(x4, x4, w0, w1, b_eff)

    if d2p != d2:
        out = out[..., :d2]
    return out.reshape(b, H2 * W2, d2)


def _reference(x, input_shape, gamma, beta, w, bias):
    h, w_sp = input_shape
    b, length, dim = x.shape
    xg = x.reshape(b, h, w_sp, dim)
    x0 = xg[:, 0::2, 0::2, :]
    x1 = xg[:, 1::2, 0::2, :]
    x2 = xg[:, 0::2, 1::2, :]
    x3 = xg[:, 1::2, 1::2, :]
    xm = jnp.concatenate([x0, x1, x2, x3], axis=-1).reshape(b, -1, 4 * dim)
    mean = jnp.mean(xm, axis=-1, keepdims=True)
    var = jnp.mean((xm - mean) ** 2, axis=-1, keepdims=True)
    xn = (xm - mean) / jnp.sqrt(var + _EPS)
    xn = xn * gamma[0] + beta[0]
    return jnp.einsum("blk,kn->bln", xn, w) + bias[0]


if __name__ == "__main__":
    # small shapes: b=2, h=w=16, dim=32 -> x: (2, 256, 32), out: (2, 64, 64)
    b, h, w_sp, dim = 2, 16, 16, 32
    key = jax.random.PRNGKey(0)
    kx, kg, kbeta, kw, kb = jax.random.split(key, 5)

    x = jax.random.normal(kx, (b, h * w_sp, dim), dtype=jnp.float32)
    gamma = 1.0 + 0.1 * jax.random.normal(kg, (1, 4 * dim), dtype=jnp.float32)
    beta = 0.1 * jax.random.normal(kbeta, (1, 4 * dim), dtype=jnp.float32)
    w = jax.random.normal(kw, (4 * dim, 2 * dim), dtype=jnp.float32) * 0.02
    bias = jax.random.normal(kb, (1, 2 * dim), dtype=jnp.float32) * 0.02

    pm = jax.jit(functools.partial(patch_merging, input_shape=(h, w_sp)))
    out = pm(x, gamma=gamma, beta=beta, w=w, bias=bias)
    out = jax.block_until_ready(out)

    ref = _reference(x, (h, w_sp), gamma, beta, w, bias)
    assert out.shape == (b, (h // 2) * (w_sp // 2), 2 * dim)
    assert jnp.allclose(out, ref, atol=2e-4, rtol=2e-4), \
        float(jnp.max(jnp.abs(out - ref)))

    print("KERNEL_OK")
</pallas_src>

<mosaic_0001>
module attributes {stable_mosaic.version = 11 : i64} {
  func.func @_patch_merge_kernel(%arg0: i32, %arg1: memref<16x1x8x64xf32, #tpu.memory_space<vmem>>, %arg2: memref<16x1x8x64xf32, #tpu.memory_space<vmem>>, %arg3: memref<64x128xf32, #tpu.memory_space<vmem>>, %arg4: memref<64x128xf32, #tpu.memory_space<vmem>>, %arg5: memref<1x128xf32, #tpu.memory_space<vmem>>, %arg6: memref<16x8x128xf32, #tpu.memory_space<vmem>>) attributes {dimension_semantics = [#tpu.dimension_semantics<parallel>], iteration_bounds = array<i64: 1>, scalar_prefetch = 0 : i64, scratch_operands = 0 : i64, tpu.core_type = #tpu.core_type<tc>, window_params = [{transform_indices = @transform_0, window_bounds = array<i64: 16, 1, 8, 64>}, {transform_indices = @transform_1, window_bounds = array<i64: 16, 1, 8, 64>}, {pipeline_mode = #tpu.pipeline_mode<synchronous>, transform_indices = @transform_2, window_bounds = array<i64: 64, 128>}, {pipeline_mode = #tpu.pipeline_mode<synchronous>, transform_indices = @transform_3, window_bounds = array<i64: 64, 128>}, {pipeline_mode = #tpu.pipeline_mode<synchronous>, transform_indices = @transform_4, window_bounds = array<i64: 1, 128>}, {transform_indices = @transform_5, window_bounds = array<i64: 16, 8, 128>}]} {
    %c0 = arith.constant 0 : index
    %c0_0 = arith.constant 0 : index
    %c0_1 = arith.constant 0 : index
    %c0_2 = arith.constant 0 : index
    %0 = vector.load %arg1[%c0, %c0_0, %c0_1, %c0_2] : memref<16x1x8x64xf32, #tpu.memory_space<vmem>>, vector<16x1x8x64xf32>
    %1 = vector.shape_cast %0 : vector<16x1x8x64xf32> to vector<16x8x64xf32>
    %2 = vector.shape_cast %1 : vector<16x8x64xf32> to vector<128x64xf32>
    %c0_3 = arith.constant 0 : index
    %c0_4 = arith.constant 0 : index
    %c0_5 = arith.constant 0 : index
    %c0_6 = arith.constant 0 : index
    %3 = vector.load %arg2[%c0_3, %c0_4, %c0_5, %c0_6] : memref<16x1x8x64xf32, #tpu.memory_space<vmem>>, vector<16x1x8x64xf32>
    %4 = vector.shape_cast %3 : vector<16x1x8x64xf32> to vector<16x8x64xf32>
    %5 = vector.shape_cast %4 : vector<16x8x64xf32> to vector<128x64xf32>
    %cst = arith.constant dense<0.000000e+00> : vector<128xf32>
    %6 = vector.multi_reduction <add>, %2, %cst [1] : vector<128x64xf32> to vector<128xf32>
    %7 = vector.shape_cast %6 : vector<128xf32> to vector<128x1xf32>
    %cst_7 = arith.constant dense<0.000000e+00> : vector<128xf32>
    %8 = vector.multi_reduction <add>, %5, %cst_7 [1] : vector<128x64xf32> to vector<128xf32>
    %9 = vector.shape_cast %8 : vector<128xf32> to vector<128x1xf32>
    %10 = arith.addf %7, %9 : vector<128x1xf32>
    %cst_8 = arith.constant 7.812500e-03 : f32
    %11 = vector.broadcast %cst_8 : f32 to vector<128x1xf32>
    %12 = arith.mulf %10, %11 : vector<128x1xf32>
    %13 = vector.broadcast %12 : vector<128x1xf32> to vector<128x64xf32>
    %14 = arith.subf %2, %13 : vector<128x64xf32>
    %15 = vector.broadcast %12 : vector<128x1xf32> to vector<128x64xf32>
    %16 = arith.subf %5, %15 : vector<128x64xf32>
    %17 = arith.mulf %14, %14 : vector<128x64xf32>
    %cst_9 = arith.constant dense<0.000000e+00> : vector<128xf32>
    %18 = vector.multi_reduction <add>, %17, %cst_9 [1] : vector<128x64xf32> to vector<128xf32>
    %19 = vector.shape_cast %18 : vector<128xf32> to vector<128x1xf32>
    %20 = arith.mulf %16, %16 : vector<128x64xf32>
    %cst_10 = arith.constant dense<0.000000e+00> : vector<128xf32>
    %21 = vector.multi_reduction <add>, %20, %cst_10 [1] : vector<128x64xf32> to vector<128xf32>
    %22 = vector.shape_cast %21 : vector<128xf32> to vector<128x1xf32>
    %23 = arith.addf %19, %22 : vector<128x1xf32>
    %cst_11 = arith.constant 7.812500e-03 : f32
    %24 = vector.broadcast %cst_11 : f32 to vector<128x1xf32>
    %25 = arith.mulf %23, %24 : vector<128x1xf32>
    %cst_12 = arith.constant 9.99999974E-6 : f32
    %26 = vector.broadcast %cst_12 : f32 to vector<128x1xf32>
    %27 = arith.addf %25, %26 : vector<128x1xf32>
    %28 = math.rsqrt %27 : vector<128x1xf32>
    %29 = vector.broadcast %28 : vector<128x1xf32> to vector<128x64xf32>
    %30 = arith.mulf %14, %29 : vector<128x64xf32>
    %31 = vector.broadcast %28 : vector<128x1xf32> to vector<128x64xf32>
    %32 = arith.mulf %16, %31 : vector<128x64xf32>
    %c0_13 = arith.constant 0 : index
    %c0_14 = arith.constant 0 : index
    %33 = vector.load %arg3[%c0_13, %c0_14] : memref<64x128xf32, #tpu.memory_space<vmem>>, vector<64x128xf32>
    %cst_15 = arith.constant dense<0.000000e+00> : vector<128x128xf32>
    %34 = tpu.matmul %30, %33, %cst_15 {dimension_numbers = #tpu.dot_dimension_numbers<[1], [0], [0], [1], [0, 0, 1, 1], [], []>} : vector<128x64xf32>, vector<64x128xf32>, vector<128x128xf32> -> vector<128x128xf32>
    %c0_16 = arith.constant 0 : index
    %c0_17 = arith.constant 0 : index
    %35 = vector.load %arg4[%c0_16, %c0_17] : memref<64x128xf32, #tpu.memory_space<vmem>>, vector<64x128xf32>
    %cst_18 = arith.constant dense<0.000000e+00> : vector<128x128xf32>
    %36 = tpu.matmul %32, %35, %cst_18 {dimension_numbers = #tpu.dot_dimension_numbers<[1], [0], [0], [1], [0, 0, 1, 1], [], []>} : vector<128x64xf32>, vector<64x128xf32>, vector<128x128xf32> -> vector<128x128xf32>
    %37 = arith.addf %34, %36 : vector<128x128xf32>
    %c0_19 = arith.constant 0 : index
    %c0_20 = arith.constant 0 : index
    %38 = vector.load %arg5[%c0_19, %c0_20] : memref<1x128xf32, #tpu.memory_space<vmem>>, vector<1x128xf32>
    %39 = vector.broadcast %38 : vector<1x128xf32> to vector<128x128xf32>
    %40 = arith.addf %37, %39 : vector<128x128xf32>
    %41 = vector.shape_cast %40 : vector<128x128xf32> to vector<16x8x128xf32>
    %c0_21 = arith.constant 0 : index
    %c0_22 = arith.constant 0 : index
    %c0_23 = arith.constant 0 : index
    %42 = vector.load %arg6[%c0_21, %c0_22, %c0_23] : memref<16x8x128xf32, #tpu.memory_space<vmem>>, vector<16x8x128xf32>
    tpu.vector_store %arg6[%c0_21, %c0_22, %c0_23], %41 {strides = array<i32>} : memref<16x8x128xf32, #tpu.memory_space<vmem>>, vector<16x8x128xf32>,
    return
  }
  func.func @transform_0(%arg0: i32) -> (i32, i32, i32, i32) {
    %c0_i32 = arith.constant 0 : i32
    %c0_i32_0 = arith.constant 0 : i32
    %c0_i32_1 = arith.constant 0 : i32
    %c0_i32_2 = arith.constant 0 : i32
    return %arg0, %c0_i32, %c0_i32_0, %c0_i32_1 : i32, i32, i32, i32
  }
  func.func @transform_1(%arg0: i32) -> (i32, i32, i32, i32) {
    %c1_i32 = arith.constant 1 : i32
    %c0_i32 = arith.constant 0 : i32
    %c0_i32_0 = arith.constant 0 : i32
    %c0_i32_1 = arith.constant 0 : i32
    return %arg0, %c1_i32, %c0_i32, %c0_i32_0 : i32, i32, i32, i32
  }
  func.func @transform_2(%arg0: i32) -> (i32, i32) {
    %c0_i32 = arith.constant 0 : i32
    %c0_i32_0 = arith.constant 0 : i32
    %c0_i32_1 = arith.constant 0 : i32
    return %c0_i32, %c0_i32_0 : i32, i32
  }
  func.func @transform_3(%arg0: i32) -> (i32, i32) {
    %c0_i32 = arith.constant 0 : i32
    %c0_i32_0 = arith.constant 0 : i32
    %c0_i32_1 = arith.constant 0 : i32
    return %c0_i32, %c0_i32_0 : i32, i32
  }
  func.func @transform_4(%arg0: i32) -> (i32, i32) {
    %c0_i32 = arith.constant 0 : i32
    %c0_i32_0 = arith.constant 0 : i32
    %c0_i32_1 = arith.constant 0 : i32
    return %c0_i32, %c0_i32_0 : i32, i32
  }
  func.func @transform_5(%arg0: i32) -> (i32, i32, i32) {
    %c0_i32 = arith.constant 0 : i32
    %c0_i32_0 = arith.constant 0 : i32
    %c0_i32_1 = arith.constant 0 : i32
    return %arg0, %c0_i32, %c0_i32_0 : i32, i32, i32
  }
}

</mosaic_0001>

<llo_original>
// kernel: patch_merging.1
$region0: #{patch_merging.1}
  #allocation0 [shape = 'u32[]', space=smem, size = 0x4, offset = 0x4, fixed_abs, tag = 'smem constant byte address 0x4 - core index']
  #allocation1 [shape = 'u32[144,128]{1,0:T(1,128)}', space=vmem, size = 0x12000, scoped, tag = 'internal scratch']
  %s0 = inlined_call_operand.vmem [shape: f32[16,2,8,64], index: 0, kind: input, shape index: {}, may-alias: {0,1}]
  %s1 = inlined_call_operand.vmem [shape: f32[16,2,8,64], index: 1, kind: input, shape index: {}, may-alias: {0,1}]
  %s2 = inlined_call_operand.vmem [shape: f32[64,128], index: 2, kind: input, shape index: {}]
  %s3 = inlined_call_operand.vmem [shape: f32[64,128], index: 3, kind: input, shape index: {}]
  %s4 = inlined_call_operand.vmem [shape: f32[1,128], index: 4, kind: input, shape index: {}]
  %s5 = inlined_call_operand.hbm [shape: f32[16,8,128], index: 5, kind: output, shape index: {}]
  %s6 = sld [smem:[#allocation0]]
  $region106: #{patch_merging.1} parent=0
    _
  %s8 = ssub.s32 1, %s6
  %s9 = scalar_select 0, %s8, %s6
  $region1: #{patch_merging.1} parent=0
    #allocation2 [shape = 'u8[65536]{0}', space=vmem, size = 0x10000, scoped, tag = 'input window, operand 0, single buffered']
    #allocation3 [shape = 'u8[65536]{0}', space=vmem, size = 0x10000, scoped, tag = 'input window, operand 1, single buffered']
    #allocation4 [shape = 'u8[65536]{0}', space=vmem, size = 0x10000, scoped, tag = 'output window, operand 0, single buffered']
    #allocation5 [shape = 's32[1]{0}', space=sflag, size = 0x4, scoped, tag = 'scoped memory for patch_merging.1']
    %10 = vsyncpa [#allocation5], 0
    // Predicated region
    $region2: #{patch_merging.1} parent=1 // pred_check
      _
    $region3: #{patch_merging.1} parent=1 // pred_check_branch
      %12 = sbr.rel (0) target = $region5
    $region4: #{patch_merging.1} parent=1 // pred_region
      // Predicated region
      $region6: #{patch_merging.1} parent=4 // pred_check
        _
      $region7: #{patch_merging.1} parent=4 // pred_check_branch
        %14 = sbr.rel (0) target = $region9
      $region8: #{patch_merging.1} parent=4 // pred_region
        // Predicated region
        $region10: #{patch_merging.1} parent=8 // pred_check
          _
        $region11: #{patch_merging.1} parent=8 // pred_check_branch
          %16 = sbr.rel (0) target = $region13
        $region12: #{patch_merging.1} parent=8 // pred_region
          // Predicated region
          $region25: #{patch_merging.1} parent=12 // pred_check
            _
          $region26: #{patch_merging.1} parent=12 // pred_check_branch
            %61 = sbr.rel (0) target = $region28
          $region27: #{patch_merging.1} parent=12 // pred_region
            loop: start=0, step=1, limit=1
            $region29: #{patch_merging.1} parent=27 // loop_pre_header
              _
            $region30: #{patch_merging.1} parent=27 // loop_header
              %s63 = sphi 0, %s67
              %p64 = scmp.ge.s32.totalorder %s63, 1
              %s68 = sphi %s0, %s0
              %s69 = sphi [#allocation2], [#allocation2]
            $region31: #{patch_merging.1} parent=27 // loop_header_branch
              %66 = sbr.rel (%p64) target = $region35
            $region32: #{patch_merging.1} parent=27 // loop_body
              %v70 = vld [vmem:[%s68] sm:$0xff]
              %71 = vst [vmem:[%s69] sm:$0xff] %v70
              %v72 = vld [vmem:[%s68 + $0x10] sm:$0xff]
              %73 = vst [vmem:[%s69 + $0x8] sm:$0xff] %v72
              %v74 = vld [vmem:[%s68 + $0x20] sm:$0xff]
              %75 = vst [vmem:[%s69 + $0x10] sm:$0xff] %v74
              %v76 = vld [vmem:[%s68 + $0x30] sm:$0xff]
              %77 = vst [vmem:[%s69 + $0x18] sm:$0xff] %v76
              %v78 = vld [vmem:[%s68 + $0x40] sm:$0xff]
              %79 = vst [vmem:[%s69 + $0x20] sm:$0xff] %v78
              %v80 = vld [vmem:[%s68 + $0x50] sm:$0xff]
              %81 = vst [vmem:[%s69 + $0x28] sm:$0xff] %v80
              %v82 = vld [vmem:[%s68 + $0x60] sm:$0xff]
              %83 = vst [vmem:[%s69 + $0x30] sm:$0xff] %v82
              %v84 = vld [vmem:[%s68 + $0x70] sm:$0xff]
              %85 = vst [vmem:[%s69 + $0x38] sm:$0xff] %v84
              %v86 = vld [vmem:[%s68 + $0x80] sm:$0xff]
              %87 = vst [vmem:[%s69 + $0x40] sm:$0xff] %v86
              %v88 = vld [vmem:[%s68 + $0x90] sm:$0xff]
              %89 = vst [vmem:[%s69 + $0x48] sm:$0xff] %v88
              %v90 = vld [vmem:[%s68 + $0xa0] sm:$0xff]
              %91 = vst [vmem:[%s69 + $0x50] sm:$0xff] %v90
              %v92 = vld [vmem:[%s68 + $0xb0] sm:$0xff]
              %93 = vst [vmem:[%s69 + $0x58] sm:$0xff] %v92
              %v94 = vld [vmem:[%s68 + $0xc0] sm:$0xff]
              %95 = vst [vmem:[%s69 + $0x60] sm:$0xff] %v94
              %v96 = vld [vmem:[%s68 + $0xd0] sm:$0xff]
              %97 = vst [vmem:[%s69 + $0x68] sm:$0xff] %v96
              %v98 = vld [vmem:[%s68 + $0xe0] sm:$0xff]
              %99 = vst [vmem:[%s69 + $0x70] sm:$0xff] %v98
              %v100 = vld [vmem:[%s68 + $0xf0] sm:$0xff]
              %101 = vst [vmem:[%s69 + $0x78] sm:$0xff] %v100
            $region33: #{patch_merging.1} parent=27 // loop_footer
              %s67 = sadd.s32 1, %s63
            $region34: #{patch_merging.1} parent=27 // loop_footer_branch
              %62 = sbr.rel target = $region30
            $region35: #{patch_merging.1} parent=27 // loop_exit
              _
          $region28: #{patch_merging.1} parent=12 // pred_fallthru
            _
          // Predicated region
          $region36: #{patch_merging.1} parent=12 // pred_check
            _
          $region37: #{patch_merging.1} parent=12 // pred_check_branch
            %103 = sbr.rel target = $region39
          $region38: #{patch_merging.1} parent=12 // pred_region
            _
          $region39: #{patch_merging.1} parent=12 // pred_fallthru
            _
        $region13: #{patch_merging.1} parent=8 // pred_fallthru
          _
        // Predicated region
        $region14: #{patch_merging.1} parent=8 // pred_check
          _
        $region15: #{patch_merging.1} parent=8 // pred_check_branch
          %18 = sbr.rel target = $region17
        $region16: #{patch_merging.1} parent=8 // pred_region
          loop: start=0, step=1, limit=1
          $region18: #{patch_merging.1} parent=16 // loop_pre_header
            _
          $region19: #{patch_merging.1} parent=16 // loop_header
            %s21 = sphi 0, %s25
            %p22 = scmp.ge.s32.totalorder %s21, 1
            %s26 = sphi %s0, %s0
            %s27 = sphi [#allocation2], [#allocation2]
          $region20: #{patch_merging.1} parent=16 // loop_header_branch
            %24 = sbr.rel (%p22) target = $region24
          $region21: #{patch_merging.1} parent=16 // loop_body
            %v28 = vld [vmem:[%s26] sm:$0xff]
            %29 = vst [vmem:[%s27] sm:$0xff] %v28
            %v30 = vld [vmem:[%s26 + $0x10] sm:$0xff]
            %31 = vst [vmem:[%s27 + $0x8] sm:$0xff] %v30
            %v32 = vld [vmem:[%s26 + $0x20] sm:$0xff]
            %33 = vst [vmem:[%s27 + $0x10] sm:$0xff] %v32
            %v34 = vld [vmem:[%s26 + $0x30] sm:$0xff]
            %35 = vst [vmem:[%s27 + $0x18] sm:$0xff] %v34
            %v36 = vld [vmem:[%s26 + $0x40] sm:$0xff]
            %37 = vst [vmem:[%s27 + $0x20] sm:$0xff] %v36
            %v38 = vld [vmem:[%s26 + $0x50] sm:$0xff]
            %39 = vst [vmem:[%s27 + $0x28] sm:$0xff] %v38
            %v40 = vld [vmem:[%s26 + $0x60] sm:$0xff]
            %41 = vst [vmem:[%s27 + $0x30] sm:$0xff] %v40
            %v42 = vld [vmem:[%s26 + $0x70] sm:$0xff]
            %43 = vst [vmem:[%s27 + $0x38] sm:$0xff] %v42
            %v44 = vld [vmem:[%s26 + $0x80] sm:$0xff]
            %45 = vst [vmem:[%s27 + $0x40] sm:$0xff] %v44
            %v46 = vld [vmem:[%s26 + $0x90] sm:$0xff]
            %47 = vst [vmem:[%s27 + $0x48] sm:$0xff] %v46
            %v48 = vld [vmem:[%s26 + $0xa0] sm:$0xff]
            %49 = vst [vmem:[%s27 + $0x50] sm:$0xff] %v48
            %v50 = vld [vmem:[%s26 + $0xb0] sm:$0xff]
            %51 = vst [vmem:[%s27 + $0x58] sm:$0xff] %v50
            %v52 = vld [vmem:[%s26 + $0xc0] sm:$0xff]
            %53 = vst [vmem:[%s27 + $0x60] sm:$0xff] %v52
            %v54 = vld [vmem:[%s26 + $0xd0] sm:$0xff]
            %55 = vst [vmem:[%s27 + $0x68] sm:$0xff] %v54
            %v56 = vld [vmem:[%s26 + $0xe0] sm:$0xff]
            %57 = vst [vmem:[%s27 + $0x70] sm:$0xff] %v56
            %v58 = vld [vmem:[%s26 + $0xf0] sm:$0xff]
            %59 = vst [vmem:[%s27 + $0x78] sm:$0xff] %v58
          $region22: #{patch_merging.1} parent=16 // loop_footer
            %s25 = sadd.s32 1, %s21
          $region23: #{patch_merging.1} parent=16 // loop_footer_branch
            %20 = sbr.rel target = $region19
          $region24: #{patch_merging.1} parent=16 // loop_exit
            _
        $region17: #{patch_merging.1} parent=8 // pred_fallthru
          _
      $region9: #{patch_merging.1} parent=4 // pred_fallthru
        _
      %104 = vnop
    $region5: #{patch_merging.1} parent=1 // pred_fallthru
      _
    // Predicated region
    $region40: #{patch_merging.1} parent=1 // pred_check
      _
    $region41: #{patch_merging.1} parent=1 // pred_check_branch
      %106 = sbr.rel (0) target = $region43
    $region42: #{patch_merging.1} parent=1 // pred_region
      %s107 = scalar_lea.vmem %s1, 8
      // Predicated region
      $region44: #{patch_merging.1} parent=42 // pred_check
        _
      $region45: #{patch_merging.1} parent=42 // pred_check_branch
        %109 = sbr.rel (0) target = $region47
      $region46: #{patch_merging.1} parent=42 // pred_region
        // Predicated region
        $region48: #{patch_merging.1} parent=46 // pred_check
          _
        $region49: #{patch_merging.1} parent=46 // pred_check_branch
          %111 = sbr.rel (0) target = $region51
        $region50: #{patch_merging.1} parent=46 // pred_region
          // Predicated region
          $region63: #{patch_merging.1} parent=50 // pred_check
            _
          $region64: #{patch_merging.1} parent=50 // pred_check_branch
            %156 = sbr.rel (0) target = $region66
          $region65: #{patch_merging.1} parent=50 // pred_region
            loop: start=0, step=1, limit=1
            $region67: #{patch_merging.1} parent=65 // loop_pre_header
              _
            $region68: #{patch_merging.1} parent=65 // loop_header
              %s158 = sphi 0, %s162
              %p159 = scmp.ge.s32.totalorder %s158, 1
              %s163 = sphi %s107, %s107
              %s164 = sphi [#allocation3], [#allocation3]
            $region69: #{patch_merging.1} parent=65 // loop_header_branch
              %161 = sbr.rel (%p159) target = $region73
            $region70: #{patch_merging.1} parent=65 // loop_body
              %v165 = vld [vmem:[%s163] sm:$0xff]
              %166 = vst [vmem:[%s164] sm:$0xff] %v165
              %v167 = vld [vmem:[%s163 + $0x10] sm:$0xff]
              %168 = vst [vmem:[%s164 + $0x8] sm:$0xff] %v167
              %v169 = vld [vmem:[%s163 + $0x20] sm:$0xff]
              %170 = vst [vmem:[%s164 + $0x10] sm:$0xff] %v169
              %v171 = vld [vmem:[%s163 + $0x30] sm:$0xff]
              %172 = vst [vmem:[%s164 + $0x18] sm:$0xff] %v171
              %v173 = vld [vmem:[%s163 + $0x40] sm:$0xff]
              %174 = vst [vmem:[%s164 + $0x20] sm:$0xff] %v173
              %v175 = vld [vmem:[%s163 + $0x50] sm:$0xff]
              %176 = vst [vmem:[%s164 + $0x28] sm:$0xff] %v175
              %v177 = vld [vmem:[%s163 + $0x60] sm:$0xff]
              %178 = vst [vmem:[%s164 + $0x30] sm:$0xff] %v177
              %v179 = vld [vmem:[%s163 + $0x70] sm:$0xff]
              %180 = vst [vmem:[%s164 + $0x38] sm:$0xff] %v179
              %v181 = vld [vmem:[%s163 + $0x80] sm:$0xff]
              %182 = vst [vmem:[%s164 + $0x40] sm:$0xff] %v181
              %v183 = vld [vmem:[%s163 + $0x90] sm:$0xff]
              %184 = vst [vmem:[%s164 + $0x48] sm:$0xff] %v183
              %v185 = vld [vmem:[%s163 + $0xa0] sm:$0xff]
              %186 = vst [vmem:[%s164 + $0x50] sm:$0xff] %v185
              %v187 = vld [vmem:[%s163 + $0xb0] sm:$0xff]
              %188 = vst [vmem:[%s164 + $0x58] sm:$0xff] %v187
              %v189 = vld [vmem:[%s163 + $0xc0] sm:$0xff]
              %190 = vst [vmem:[%s164 + $0x60] sm:$0xff] %v189
              %v191 = vld [vmem:[%s163 + $0xd0] sm:$0xff]
              %192 = vst [vmem:[%s164 + $0x68] sm:$0xff] %v191
              %v193 = vld [vmem:[%s163 + $0xe0] sm:$0xff]
              %194 = vst [vmem:[%s164 + $0x70] sm:$0xff] %v193
              %v195 = vld [vmem:[%s163 + $0xf0] sm:$0xff]
              %196 = vst [vmem:[%s164 + $0x78] sm:$0xff] %v195
            $region71: #{patch_merging.1} parent=65 // loop_footer
              %s162 = sadd.s32 1, %s158
            $region72: #{patch_merging.1} parent=65 // loop_footer_branch
              %157 = sbr.rel target = $region68
            $region73: #{patch_merging.1} parent=65 // loop_exit
              _
          $region66: #{patch_merging.1} parent=50 // pred_fallthru
            _
          // Predicated region
          $region74: #{patch_merging.1} parent=50 // pred_check
            _
          $region75: #{patch_merging.1} parent=50 // pred_check_branch
            %198 = sbr.rel target = $region77
          $region76: #{patch_merging.1} parent=50 // pred_region
            _
          $region77: #{patch_merging.1} parent=50 // pred_fallthru
            _
        $region51: #{patch_merging.1} parent=46 // pred_fallthru
          _
        // Predicated region
        $region52: #{patch_merging.1} parent=46 // pred_check
          _
        $region53: #{patch_merging.1} parent=46 // pred_check_branch
          %113 = sbr.rel target = $region55
        $region54: #{patch_merging.1} parent=46 // pred_region
          loop: start=0, step=1, limit=1
          $region56: #{patch_merging.1} parent=54 // loop_pre_header
            _
          $region57: #{patch_merging.1} parent=54 // loop_header
            %s116 = sphi 0, %s120
            %p117 = scmp.ge.s32.totalorder %s116, 1
            %s121 = sphi %s107, %s107
            %s122 = sphi [#allocation3], [#allocation3]
          $region58: #{patch_merging.1} parent=54 // loop_header_branch
            %119 = sbr.rel (%p117) target = $region62
          $region59: #{patch_merging.1} parent=54 // loop_body
            %v123 = vld [vmem:[%s121] sm:$0xff]
            %124 = vst [vmem:[%s122] sm:$0xff] %v123
            %v125 = vld [vmem:[%s121 + $0x10] sm:$0xff]
            %126 = vst [vmem:[%s122 + $0x8] sm:$0xff] %v125
            %v127 = vld [vmem:[%s121 + $0x20] sm:$0xff]
            %128 = vst [vmem:[%s122 + $0x10] sm:$0xff] %v127
            %v129 = vld [vmem:[%s121 + $0x30] sm:$0xff]
            %130 = vst [vmem:[%s122 + $0x18] sm:$0xff] %v129
            %v131 = vld [vmem:[%s121 + $0x40] sm:$0xff]
            %132 = vst [vmem:[%s122 + $0x20] sm:$0xff] %v131
            %v133 = vld [vmem:[%s121 + $0x50] sm:$0xff]
            %134 = vst [vmem:[%s122 + $0x28] sm:$0xff] %v133
            %v135 = vld [vmem:[%s121 + $0x60] sm:$0xff]
            %136 = vst [vmem:[%s122 + $0x30] sm:$0xff] %v135
            %v137 = vld [vmem:[%s121 + $0x70] sm:$0xff]
            %138 = vst [vmem:[%s122 + $0x38] sm:$0xff] %v137
            %v139 = vld [vmem:[%s121 + $0x80] sm:$0xff]
            %140 = vst [vmem:[%s122 + $0x40] sm:$0xff] %v139
            %v141 = vld [vmem:[%s121 + $0x90] sm:$0xff]
            %142 = vst [vmem:[%s122 + $0x48] sm:$0xff] %v141
            %v143 = vld [vmem:[%s121 + $0xa0] sm:$0xff]
            %144 = vst [vmem:[%s122 + $0x50] sm:$0xff] %v143
            %v145 = vld [vmem:[%s121 + $0xb0] sm:$0xff]
            %146 = vst [vmem:[%s122 + $0x58] sm:$0xff] %v145
            %v147 = vld [vmem:[%s121 + $0xc0] sm:$0xff]
            %148 = vst [vmem:[%s122 + $0x60] sm:$0xff] %v147
            %v149 = vld [vmem:[%s121 + $0xd0] sm:$0xff]
            %150 = vst [vmem:[%s122 + $0x68] sm:$0xff] %v149
            %v151 = vld [vmem:[%s121 + $0xe0] sm:$0xff]
            %152 = vst [vmem:[%s122 + $0x70] sm:$0xff] %v151
            %v153 = vld [vmem:[%s121 + $0xf0] sm:$0xff]
            %154 = vst [vmem:[%s122 + $0x78] sm:$0xff] %v153
          $region60: #{patch_merging.1} parent=54 // loop_footer
            %s120 = sadd.s32 1, %s116
          $region61: #{patch_merging.1} parent=54 // loop_footer_branch
            %115 = sbr.rel target = $region57
          $region62: #{patch_merging.1} parent=54 // loop_exit
            _
        $region55: #{patch_merging.1} parent=46 // pred_fallthru
          _
      $region47: #{patch_merging.1} parent=42 // pred_fallthru
        _
      %199 = vnop
    $region43: #{patch_merging.1} parent=1 // pred_fallthru
      _
    // Predicated region
    $region78: #{patch_merging.1} parent=1 // pred_check
      _
    $region79: #{patch_merging.1} parent=1 // pred_check_branch
      %201 = sbr.rel (0) target = $region81
    $region80: #{patch_merging.1} parent=1 // pred_region
      _
    $region81: #{patch_merging.1} parent=1 // pred_fallthru
      _
    // Predicated region
    $region82: #{patch_merging.1} parent=1 // pred_check
      _
    $region83: #{patch_merging.1} parent=1 // pred_check_branch
      %203 = sbr.rel (0) target = $region85
    $region84: #{patch_merging.1} parent=1 // pred_region
      _
    $region85: #{patch_merging.1} parent=1 // pred_fallthru
      _
    // Predicated region
    $region86: #{patch_merging.1} parent=1 // pred_check
      _
    $region87: #{patch_merging.1} parent=1 // pred_check_branch
      %205 = sbr.rel (0) target = $region89
    $region88: #{patch_merging.1} parent=1 // pred_region
      _
    $region89: #{patch_merging.1} parent=1 // pred_fallthru
      _
    // Predicated region
    $region90: #{patch_merging.1} parent=1 // pred_check
      _
    $region91: #{patch_merging.1} parent=1 // pred_check_branch
      %207 = sbr.rel (0) target = $region93
    $region92: #{patch_merging.1} parent=1 // pred_region
      _
    $region93: #{patch_merging.1} parent=1 // pred_fallthru
      _
    // Predicated region
    $region94: #{patch_merging.1} parent=1 // pred_check
      _
    $region95: #{patch_merging.1} parent=1 // pred_check_branch
      %209 = sbr.rel (0) target = $region97
    $region96: #{patch_merging.1} parent=1 // pred_region
      _
    $region97: #{patch_merging.1} parent=1 // pred_fallthru
      _
    %v210 = vld [vmem:[#allocation2] sm:$0xff]
    %v211 = vld [vmem:[#allocation2 + $0x8] sm:$0xff]
    %v212 = vld [vmem:[#allocation2 + $0x10] sm:$0xff]
    %v213 = vld [vmem:[#allocation2 + $0x18] sm:$0xff]
    %v214 = vld [vmem:[#allocation2 + $0x20] sm:$0xff]
    %v215 = vld [vmem:[#allocation2 + $0x28] sm:$0xff]
    %v216 = vld [vmem:[#allocation2 + $0x30] sm:$0xff]
    %v217 = vld [vmem:[#allocation2 + $0x38] sm:$0xff]
    %v218 = vld [vmem:[#allocation2 + $0x40] sm:$0xff]
    %v219 = vld [vmem:[#allocation2 + $0x48] sm:$0xff]
    %v220 = vld [vmem:[#allocation2 + $0x50] sm:$0xff]
    %v221 = vld [vmem:[#allocation2 + $0x58] sm:$0xff]
    %v222 = vld [vmem:[#allocation2 + $0x60] sm:$0xff]
    %v223 = vld [vmem:[#allocation2 + $0x68] sm:$0xff]
    %v224 = vld [vmem:[#allocation2 + $0x70] sm:$0xff]
    %v225 = vld [vmem:[#allocation2 + $0x78] sm:$0xff]
    %v226 = vld [vmem:[#allocation3] sm:$0xff]
    %v227 = vld [vmem:[#allocation3 + $0x8] sm:$0xff]
    %v228 = vld [vmem:[#allocation3 + $0x10] sm:$0xff]
    %v229 = vld [vmem:[#allocation3 + $0x18] sm:$0xff]
    %v230 = vld [vmem:[#allocation3 + $0x20] sm:$0xff]
    %v231 = vld [vmem:[#allocation3 + $0x28] sm:$0xff]
    %v232 = vld [vmem:[#allocation3 + $0x30] sm:$0xff]
    %v233 = vld [vmem:[#allocation3 + $0x38] sm:$0xff]
    %v234 = vld [vmem:[#allocation3 + $0x40] sm:$0xff]
    %v235 = vld [vmem:[#allocation3 + $0x48] sm:$0xff]
    %v236 = vld [vmem:[#allocation3 + $0x50] sm:$0xff]
    %v237 = vld [vmem:[#allocation3 + $0x58] sm:$0xff]
    %v238 = vld [vmem:[#allocation3 + $0x60] sm:$0xff]
    %v239 = vld [vmem:[#allocation3 + $0x68] sm:$0xff]
    %v240 = vld [vmem:[#allocation3 + $0x70] sm:$0xff]
    %v241 = vld [vmem:[#allocation3 + $0x78] sm:$0xff]
    %vm242 = vcmask 523264
    %v243 = vsel %vm242, %v210, 0.0
    %244 = vadd.xlane.f32.xlu0 %v243
    %v245 = vpop.xlane.xlu0 %244
    %v246 = vsel %vm242, %v211, 0.0
    %247 = vadd.xlane.f32.xlu0 %v246
    %v248 = vpop.xlane.xlu0 %247
    %v249 = vsel %vm242, %v212, 0.0
    %250 = vadd.xlane.f32.xlu0 %v249
    %v251 = vpop.xlane.xlu0 %250
    %v252 = vsel %vm242, %v213, 0.0
    %253 = vadd.xlane.f32.xlu0 %v252
    %v254 = vpop.xlane.xlu0 %253
    %v255 = vsel %vm242, %v214, 0.0
    %256 = vadd.xlane.f32.xlu0 %v255
    %v257 = vpop.xlane.xlu0 %256
    %v258 = vsel %vm242, %v215, 0.0
    %259 = vadd.xlane.f32.xlu0 %v258
    %v260 = vpop.xlane.xlu0 %259
    %v261 = vsel %vm242, %v216, 0.0
    %262 = vadd.xlane.f32.xlu0 %v261
    %v263 = vpop.xlane.xlu0 %262
    %v264 = vsel %vm242, %v217, 0.0
    %265 = vadd.xlane.f32.xlu0 %v264
    %v266 = vpop.xlane.xlu0 %265
    %v267 = vsel %vm242, %v218, 0.0
    %268 = vadd.xlane.f32.xlu0 %v267
    %v269 = vpop.xlane.xlu0 %268
    %v270 = vsel %vm242, %v219, 0.0
    %271 = vadd.xlane.f32.xlu0 %v270
    %v272 = vpop.xlane.xlu0 %271
    %v273 = vsel %vm242, %v220, 0.0
    %274 = vadd.xlane.f32.xlu0 %v273
    %v275 = vpop.xlane.xlu0 %274
    %v276 = vsel %vm242, %v221, 0.0
    %277 = vadd.xlane.f32.xlu0 %v276
    %v278 = vpop.xlane.xlu0 %277
    %v279 = vsel %vm242, %v222, 0.0
    %280 = vadd.xlane.f32.xlu0 %v279
    %v281 = vpop.xlane.xlu0 %280
    %v282 = vsel %vm242, %v223, 0.0
    %283 = vadd.xlane.f32.xlu0 %v282
    %v284 = vpop.xlane.xlu0 %283
    %v285 = vsel %vm242, %v224, 0.0
    %286 = vadd.xlane.f32.xlu0 %v285
    %v287 = vpop.xlane.xlu0 %286
    %v288 = vsel %vm242, %v225, 0.0
    %289 = vadd.xlane.f32.xlu0 %v288
    %v290 = vpop.xlane.xlu0 %289
    %v291 = vsel %vm242, %v226, 0.0
    %292 = vadd.xlane.f32.xlu0 %v291
    %v293 = vpop.xlane.xlu0 %292
    %v294 = vsel %vm242, %v227, 0.0
    %295 = vadd.xlane.f32.xlu0 %v294
    %v296 = vpop.xlane.xlu0 %295
    %v297 = vsel %vm242, %v228, 0.0
    %298 = vadd.xlane.f32.xlu0 %v297
    %v299 = vpop.xlane.xlu0 %298
    %v300 = vsel %vm242, %v229, 0.0
    %301 = vadd.xlane.f32.xlu0 %v300
    %v302 = vpop.xlane.xlu0 %301
    %v303 = vsel %vm242, %v230, 0.0
    %304 = vadd.xlane.f32.xlu0 %v303
    %v305 = vpop.xlane.xlu0 %304
    %v306 = vsel %vm242, %v231, 0.0
    %307 = vadd.xlane.f32.xlu0 %v306
    %v308 = vpop.xlane.xlu0 %307
    %v309 = vsel %vm242, %v232, 0.0
    %310 = vadd.xlane.f32.xlu0 %v309
    %v311 = vpop.xlane.xlu0 %310
    %v312 = vsel %vm242, %v233, 0.0
    %313 = vadd.xlane.f32.xlu0 %v312
    %v314 = vpop.xlane.xlu0 %313
    %v315 = vsel %vm242, %v234, 0.0
    %316 = vadd.xlane.f32.xlu0 %v315
    %v317 = vpop.xlane.xlu0 %316
    %v318 = vsel %vm242, %v235, 0.0
    %319 = vadd.xlane.f32.xlu0 %v318
    %v320 = vpop.xlane.xlu0 %319
    %v321 = vsel %vm242, %v236, 0.0
    %322 = vadd.xlane.f32.xlu0 %v321
    %v323 = vpop.xlane.xlu0 %322
    %v324 = vsel %vm242, %v237, 0.0
    %325 = vadd.xlane.f32.xlu0 %v324
    %v326 = vpop.xlane.xlu0 %325
    %v327 = vsel %vm242, %v238, 0.0
    %328 = vadd.xlane.f32.xlu0 %v327
    %v329 = vpop.xlane.xlu0 %328
    %v330 = vsel %vm242, %v239, 0.0
    %331 = vadd.xlane.f32.xlu0 %v330
    %v332 = vpop.xlane.xlu0 %331
    %v333 = vsel %vm242, %v240, 0.0
    %334 = vadd.xlane.f32.xlu0 %v333
    %v335 = vpop.xlane.xlu0 %334
    %v336 = vsel %vm242, %v241, 0.0
    %337 = vadd.xlane.f32.xlu0 %v336
    %v338 = vpop.xlane.xlu0 %337
    %v339 = vadd.f32 %v245, %v293
    %v340 = vadd.f32 %v248, %v296
    %v341 = vadd.f32 %v251, %v299
    %v342 = vadd.f32 %v254, %v302
    %v343 = vadd.f32 %v257, %v305
    %v344 = vadd.f32 %v260, %v308
    %v345 = vadd.f32 %v263, %v311
    %v346 = vadd.f32 %v266, %v314
    %v347 = vadd.f32 %v269, %v317
    %v348 = vadd.f32 %v272, %v320
    %v349 = vadd.f32 %v275, %v323
    %v350 = vadd.f32 %v278, %v326
    %v351 = vadd.f32 %v281, %v329
    %v352 = vadd.f32 %v284, %v332
    %v353 = vadd.f32 %v287, %v335
    %v354 = vadd.f32 %v290, %v338
    %v355 = vmul.f32 %v339, 0.0078125
    %v356 = vmul.f32 %v340, 0.0078125
    %v357 = vmul.f32 %v341, 0.0078125
    %v358 = vmul.f32 %v342, 0.0078125
    %v359 = vmul.f32 %v343, 0.0078125
    %v360 = vmul.f32 %v344, 0.0078125
    %v361 = vmul.f32 %v345, 0.0078125
    %v362 = vmul.f32 %v346, 0.0078125
    %v363 = vmul.f32 %v347, 0.0078125
    %v364 = vmul.f32 %v348, 0.0078125
    %v365 = vmul.f32 %v349, 0.0078125
    %v366 = vmul.f32 %v350, 0.0078125
    %v367 = vmul.f32 %v351, 0.0078125
    %v368 = vmul.f32 %v352, 0.0078125
    %v369 = vmul.f32 %v353, 0.0078125
    %v370 = vmul.f32 %v354, 0.0078125
    %v371 = vsub.f32 %v210, %v355
    %v372 = vsub.f32 %v211, %v356
    %v373 = vsub.f32 %v212, %v357
    %v374 = vsub.f32 %v213, %v358
    %v375 = vsub.f32 %v214, %v359
    %v376 = vsub.f32 %v215, %v360
    %v377 = vsub.f32 %v216, %v361
    %v378 = vsub.f32 %v217, %v362
    %v379 = vsub.f32 %v218, %v363
    %v380 = vsub.f32 %v219, %v364
    %v381 = vsub.f32 %v220, %v365
    %v382 = vsub.f32 %v221, %v366
    %v383 = vsub.f32 %v222, %v367
    %v384 = vsub.f32 %v223, %v368
    %v385 = vsub.f32 %v224, %v369
    %v386 = vsub.f32 %v225, %v370
    %v387 = vsub.f32 %v226, %v355
    %v388 = vsub.f32 %v227, %v356
    %v389 = vsub.f32 %v228, %v357
    %v390 = vsub.f32 %v229, %v358
    %v391 = vsub.f32 %v230, %v359
    %v392 = vsub.f32 %v231, %v360
    %v393 = vsub.f32 %v232, %v361
    %v394 = vsub.f32 %v233, %v362
    %v395 = vsub.f32 %v234, %v363
    %v396 = vsub.f32 %v235, %v364
    %v397 = vsub.f32 %v236, %v365
    %v398 = vsub.f32 %v237, %v366
    %v399 = vsub.f32 %v238, %v367
    %v400 = vsub.f32 %v239, %v368
    %v401 = vsub.f32 %v240, %v369
    %v402 = vsub.f32 %v241, %v370
    %v403 = vmul.f32 %v371, %v371
    %v404 = vmul.f32 %v372, %v372
    %v405 = vmul.f32 %v373, %v373
    %v406 = vmul.f32 %v374, %v374
    %v407 = vmul.f32 %v375, %v375
    %v408 = vmul.f32 %v376, %v376
    %v409 = vmul.f32 %v377, %v377
    %v410 = vmul.f32 %v378, %v378
    %v411 = vmul.f32 %v379, %v379
    %v412 = vmul.f32 %v380, %v380
    %v413 = vmul.f32 %v381, %v381
    %v414 = vmul.f32 %v382, %v382
    %v415 = vmul.f32 %v383, %v383
    %v416 = vmul.f32 %v384, %v384
    %v417 = vmul.f32 %v385, %v385
    %v418 = vmul.f32 %v386, %v386
    %v419 = vsel %vm242, %v403, 0.0
    %420 = vadd.xlane.f32.xlu0 %v419
    %v421 = vpop.xlane.xlu0 %420
    %v422 = vsel %vm242, %v404, 0.0
    %423 = vadd.xlane.f32.xlu0 %v422
    %v424 = vpop.xlane.xlu0 %423
    %v425 = vsel %vm242, %v405, 0.0
    %426 = vadd.xlane.f32.xlu0 %v425
    %v427 = vpop.xlane.xlu0 %426
    %v428 = vsel %vm242, %v406, 0.0
    %429 = vadd.xlane.f32.xlu0 %v428
    %v430 = vpop.xlane.xlu0 %429
    %v431 = vsel %vm242, %v407, 0.0
    %432 = vadd.xlane.f32.xlu0 %v431
    %v433 = vpop.xlane.xlu0 %432
    %v434 = vsel %vm242, %v408, 0.0
    %435 = vadd.xlane.f32.xlu0 %v434
    %v436 = vpop.xlane.xlu0 %435
    %v437 = vsel %vm242, %v409, 0.0
    %438 = vadd.xlane.f32.xlu0 %v437
    %v439 = vpop.xlane.xlu0 %438
    %v440 = vsel %vm242, %v410, 0.0
    %441 = vadd.xlane.f32.xlu0 %v440
    %v442 = vpop.xlane.xlu0 %441
    %v443 = vsel %vm242, %v411, 0.0
    %444 = vadd.xlane.f32.xlu0 %v443
    %v445 = vpop.xlane.xlu0 %444
    %v446 = vsel %vm242, %v412, 0.0
    %447 = vadd.xlane.f32.xlu0 %v446
    %v448 = vpop.xlane.xlu0 %447
    %v449 = vsel %vm242, %v413, 0.0
    %450 = vadd.xlane.f32.xlu0 %v449
    %v451 = vpop.xlane.xlu0 %450
    %v452 = vsel %vm242, %v414, 0.0
    %453 = vadd.xlane.f32.xlu0 %v452
    %v454 = vpop.xlane.xlu0 %453
    %v455 = vsel %vm242, %v415, 0.0
    %456 = vadd.xlane.f32.xlu0 %v455
    %v457 = vpop.xlane.xlu0 %456
    %v458 = vsel %vm242, %v416, 0.0
    %459 = vadd.xlane.f32.xlu0 %v458
    %v460 = vpop.xlane.xlu0 %459
    %v461 = vsel %vm242, %v417, 0.0
    %462 = vadd.xlane.f32.xlu0 %v461
    %v463 = vpop.xlane.xlu0 %462
    %v464 = vsel %vm242, %v418, 0.0
    %465 = vadd.xlane.f32.xlu0 %v464
    %v466 = vpop.xlane.xlu0 %465
    %v467 = vmul.f32 %v387, %v387
    %v468 = vmul.f32 %v388, %v388
    %v469 = vmul.f32 %v389, %v389
    %v470 = vmul.f32 %v390, %v390
    %v471 = vmul.f32 %v391, %v391
    %v472 = vmul.f32 %v392, %v392
    %v473 = vmul.f32 %v393, %v393
    %v474 = vmul.f32 %v394, %v394
    %v475 = vmul.f32 %v395, %v395
    %v476 = vmul.f32 %v396, %v396
    %v477 = vmul.f32 %v397, %v397
    %v478 = vmul.f32 %v398, %v398
    %v479 = vmul.f32 %v399, %v399
    %v480 = vmul.f32 %v400, %v400
    %v481 = vmul.f32 %v401, %v401
    %v482 = vmul.f32 %v402, %v402
    %v483 = vsel %vm242, %v467, 0.0
    %484 = vadd.xlane.f32.xlu0 %v483
    %v485 = vpop.xlane.xlu0 %484
    %v486 = vsel %vm242, %v468, 0.0
    %487 = vadd.xlane.f32.xlu0 %v486
    %v488 = vpop.xlane.xlu0 %487
    %v489 = vsel %vm242, %v469, 0.0
    %490 = vadd.xlane.f32.xlu0 %v489
    %v491 = vpop.xlane.xlu0 %490
    %v492 = vsel %vm242, %v470, 0.0
    %493 = vadd.xlane.f32.xlu0 %v492
    %v494 = vpop.xlane.xlu0 %493
    %v495 = vsel %vm242, %v471, 0.0
    %496 = vadd.xlane.f32.xlu0 %v495
    %v497 = vpop.xlane.xlu0 %496
    %v498 = vsel %vm242, %v472, 0.0
    %499 = vadd.xlane.f32.xlu0 %v498
    %v500 = vpop.xlane.xlu0 %499
    %v501 = vsel %vm242, %v473, 0.0
    %502 = vadd.xlane.f32.xlu0 %v501
    %v503 = vpop.xlane.xlu0 %502
    %v504 = vsel %vm242, %v474, 0.0
    %505 = vadd.xlane.f32.xlu0 %v504
    %v506 = vpop.xlane.xlu0 %505
    %v507 = vsel %vm242, %v475, 0.0
    %508 = vadd.xlane.f32.xlu0 %v507
    %v509 = vpop.xlane.xlu0 %508
    %v510 = vsel %vm242, %v476, 0.0
    %511 = vadd.xlane.f32.xlu0 %v510
    %v512 = vpop.xlane.xlu0 %511
    %v513 = vsel %vm242, %v477, 0.0
    %514 = vadd.xlane.f32.xlu0 %v513
    %v515 = vpop.xlane.xlu0 %514
    %v516 = vsel %vm242, %v478, 0.0
    %517 = vadd.xlane.f32.xlu0 %v516
    %v518 = vpop.xlane.xlu0 %517
    %v519 = vsel %vm242, %v479, 0.0
    %520 = vadd.xlane.f32.xlu0 %v519
    %v521 = vpop.xlane.xlu0 %520
    %v522 = vsel %vm242, %v480, 0.0
    %523 = vadd.xlane.f32.xlu0 %v522
    %v524 = vpop.xlane.xlu0 %523
    %v525 = vsel %vm242, %v481, 0.0
    %526 = vadd.xlane.f32.xlu0 %v525
    %v527 = vpop.xlane.xlu0 %526
    %v528 = vsel %vm242, %v482, 0.0
    %529 = vadd.xlane.f32.xlu0 %v528
    %v530 = vpop.xlane.xlu0 %529
    %v531 = vadd.f32 %v421, %v485
    %v532 = vadd.f32 %v424, %v488
    %v533 = vadd.f32 %v427, %v491
    %v534 = vadd.f32 %v430, %v494
    %v535 = vadd.f32 %v433, %v497
    %v536 = vadd.f32 %v436, %v500
    %v537 = vadd.f32 %v439, %v503
    %v538 = vadd.f32 %v442, %v506
    %v539 = vadd.f32 %v445, %v509
    %v540 = vadd.f32 %v448, %v512
    %v541 = vadd.f32 %v451, %v515
    %v542 = vadd.f32 %v454, %v518
    %v543 = vadd.f32 %v457, %v521
    %v544 = vadd.f32 %v460, %v524
    %v545 = vadd.f32 %v463, %v527
    %v546 = vadd.f32 %v466, %v530
    %v547 = vmul.f32 %v531, 0.0078125
    %v548 = vmul.f32 %v532, 0.0078125
    %v549 = vmul.f32 %v533, 0.0078125
    %v550 = vmul.f32 %v534, 0.0078125
    %v551 = vmul.f32 %v535, 0.0078125
    %v552 = vmul.f32 %v536, 0.0078125
    %v553 = vmul.f32 %v537, 0.0078125
    %v554 = vmul.f32 %v538, 0.0078125
    %v555 = vmul.f32 %v539, 0.0078125
    %v556 = vmul.f32 %v540, 0.0078125
    %v557 = vmul.f32 %v541, 0.0078125
    %v558 = vmul.f32 %v542, 0.0078125
    %v559 = vmul.f32 %v543, 0.0078125
    %v560 = vmul.f32 %v544, 0.0078125
    %v561 = vmul.f32 %v545, 0.0078125
    %v562 = vmul.f32 %v546, 0.0078125
    %v563 = vadd.f32 %v547, 1e-05
    %v564 = vadd.f32 %v548, 1e-05
    %v565 = vadd.f32 %v549, 1e-05
    %v566 = vadd.f32 %v550, 1e-05
    %v567 = vadd.f32 %v551, 1e-05
    %v568 = vadd.f32 %v552, 1e-05
    %v569 = vadd.f32 %v553, 1e-05
    %v570 = vadd.f32 %v554, 1e-05
    %v571 = vadd.f32 %v555, 1e-05
    %v572 = vadd.f32 %v556, 1e-05
    %v573 = vadd.f32 %v557, 1e-05
    %v574 = vadd.f32 %v558, 1e-05
    %v575 = vadd.f32 %v559, 1e-05
    %v576 = vadd.f32 %v560, 1e-05
    %v577 = vadd.f32 %v561, 1e-05
    %v578 = vadd.f32 %v562, 1e-05
    %v579 = vrsqrt.pop %v563
    %v580 = vrsqrt.pop %v564
    %v581 = vrsqrt.pop %v565
    %v582 = vrsqrt.pop %v566
    %v583 = vrsqrt.pop %v567
    %v584 = vrsqrt.pop %v568
    %v585 = vrsqrt.pop %v569
    %v586 = vrsqrt.pop %v570
    %v587 = vrsqrt.pop %v571
    %v588 = vrsqrt.pop %v572
    %v589 = vrsqrt.pop %v573
    %v590 = vrsqrt.pop %v574
    %v591 = vrsqrt.pop %v575
    %v592 = vrsqrt.pop %v576
    %v593 = vrsqrt.pop %v577
    %v594 = vrsqrt.pop %v578
    %v595 = vmul.f32 %v371, %v579
    %v596 = vmul.f32 %v372, %v580
    %v597 = vmul.f32 %v373, %v581
    %v598 = vmul.f32 %v374, %v582
    %v599 = vmul.f32 %v375, %v583
    %v600 = vmul.f32 %v376, %v584
    %v601 = vmul.f32 %v377, %v585
    %v602 = vmul.f32 %v378, %v586
    %v603 = vmul.f32 %v379, %v587
    %v604 = vmul.f32 %v380, %v588
    %v605 = vmul.f32 %v381, %v589
    %v606 = vmul.f32 %v382, %v590
    %v607 = vmul.f32 %v383, %v591
    %v608 = vmul.f32 %v384, %v592
    %v609 = vmul.f32 %v385, %v593
    %v610 = vmul.f32 %v386, %v594
    %v611 = vmul.f32 %v387, %v579
    %v612 = vmul.f32 %v388, %v580
    %v613 = vmul.f32 %v389, %v581
    %v614 = vmul.f32 %v390, %v582
    %v615 = vmul.f32 %v391, %v583
    %v616 = vmul.f32 %v392, %v584
    %v617 = vmul.f32 %v393, %v585
    %v618 = vmul.f32 %v394, %v586
    %v619 = vmul.f32 %v395, %v587
    %v620 = vmul.f32 %v396, %v588
    %v621 = vmul.f32 %v397, %v589
    %v622 = vmul.f32 %v398, %v590
    %v623 = vmul.f32 %v399, %v591
    %v624 = vmul.f32 %v400, %v592
    %v625 = vmul.f32 %v401, %v593
    %v626 = vmul.f32 %v402, %v594
    %v627 = vld [vmem:[%s2] sm:$0xff]
    %v628 = vld [vmem:[%s2 + $0x8] sm:$0xff]
    %v629 = vld [vmem:[%s2 + $0x10] sm:$0xff]
    %v630 = vld [vmem:[%s2 + $0x18] sm:$0xff]
    %v631 = vld [vmem:[%s2 + $0x20] sm:$0xff]
    %v632 = vld [vmem:[%s2 + $0x28] sm:$0xff]
    %v633 = vld [vmem:[%s2 + $0x30] sm:$0xff]
    %v634 = vld [vmem:[%s2 + $0x38] sm:$0xff]
    %v635 = vld [vmem:[%s3] sm:$0xff]
    %v636 = vld [vmem:[%s3 + $0x8] sm:$0xff]
    %v637 = vld [vmem:[%s3 + $0x10] sm:$0xff]
    %v638 = vld [vmem:[%s3 + $0x18] sm:$0xff]
    %v639 = vld [vmem:[%s3 + $0x20] sm:$0xff]
    %v640 = vld [vmem:[%s3 + $0x28] sm:$0xff]
    %v641 = vld [vmem:[%s3 + $0x30] sm:$0xff]
    %v642 = vld [vmem:[%s3 + $0x38] sm:$0xff]
    %v644 = vsel %vm242, %v611, 0
    %v647 = vsel %vm242, %v612, 0
    %v650 = vsel %vm242, %v613, 0
    %v653 = vsel %vm242, %v614, 0
    %v656 = vsel %vm242, %v615, 0
    %v659 = vsel %vm242, %v616, 0
    %v662 = vsel %vm242, %v617, 0
    %v665 = vsel %vm242, %v618, 0
    %v668 = vsel %vm242, %v619, 0
    %v671 = vsel %vm242, %v620, 0
    %v674 = vsel %vm242, %v621, 0
    %v677 = vsel %vm242, %v622, 0
    %v680 = vsel %vm242, %v623, 0
    %v683 = vsel %vm242, %v624, 0
    %v686 = vsel %vm242, %v625, 0
    %v689 = vsel %vm242, %v626, 0
    %691 = vmatprep.subr.mxu0 0.0
    %692 = vmatpush1.msra.mxu0 %v635
    %693 = vmatprep.subr.mxu0 0.0
    %694 = vmatpush1.msra.mxu0 %v636
    %695 = vmatprep.subr.mxu0 0.0
    %696 = vmatpush1.msra.mxu0 %v637
    %697 = vmatprep.subr.mxu0 0.0
    %698 = vmatpush1.msra.mxu0 %v638
    %699 = vmatprep.subr.mxu0 0.0
    %700 = vmatpush1.msra.mxu0 %v639
    %701 = vmatprep.subr.mxu0 0.0
    %702 = vmatpush1.msra.mxu0 %v640
    %703 = vmatprep.subr.mxu0 0.0
    %704 = vmatpush1.msra.mxu0 %v641
    %705 = vmatprep.subr.mxu0 0.0
    %706 = vmatpush1.msra.mxu0 %v642
    %707 = vmatprep.subr.mxu0 0.0
    %708 = vmatpush1.msra.mxu0 0.0
    %709 = vmatprep.subr.mxu0 0.0
    %710 = vmatpush1.msra.mxu0 0.0
    %711 = vmatprep.subr.mxu0 0.0
    %712 = vmatpush1.msra.mxu0 0.0
    %713 = vmatprep.subr.mxu0 0.0
    %714 = vmatpush1.msra.mxu0 0.0
    %715 = vmatprep.subr.mxu0 0.0
    %716 = vmatpush1.msra.mxu0 0.0
    %717 = vmatprep.subr.mxu0 0.0
    %718 = vmatpush1.msra.mxu0 0.0
    %719 = vmatprep.subr.mxu0 0.0
    %720 = vmatpush1.msra.mxu0 0.0
    %721 = vmatprep.subr.mxu0 0.0
    %722 = vmatpush1.msra.mxu0 0.0
    %723 = vmatprep.subr.mxu0 0.0
    %724 = vmatpush1.msra.mxu0 0.0
    %725 = vmatprep.subr.mxu0 0.0
    %726 = vmatpush1.msra.mxu0 0.0
    %727 = vmatprep.subr.mxu0 0.0
    %728 = vmatpush1.msra.mxu0 0.0
    %729 = vmatprep.subr.mxu0 0.0
    %730 = vmatpush1.msra.mxu0 0.0
    %731 = vmatprep.subr.mxu0 0.0
    %732 = vmatpush1.msra.mxu0 0.0
    %733 = vmatprep.subr.mxu0 0.0
    %734 = vmatpush1.msra.mxu0 0.0
    %735 = vmatprep.subr.mxu0 0.0
    %736 = vmatpush1.msra.mxu0 0.0
    %737 = vmatprep.subr.mxu0 0.0
    %738 = vmatpush1.msra.mxu0 0.0
    %739 = vmatprep.subr.mxu0 0.0
    %740 = vmatpush1.msra.mxu0 0.0
    %741 = vmatprep.subr.mxu0 0.0
    %742 = vmatpush1.msra.mxu0 0.0
    %743 = vmatprep.subr.mxu0 0.0
    %744 = vmatpush1.msra.mxu0 0.0
    %745 = vmatprep.subr.mxu0 0.0
    %746 = vmatpush1.msra.mxu0 0.0
    %747 = vmatprep.subr.mxu0 0.0
    %748 = vmatpush1.msra.mxu0 0.0
    %749 = vmatprep.subr.mxu0 0.0
    %750 = vmatpush1.msra.mxu0 0.0
    %751 = vmatprep.subr.mxu0 0.0
    %752 = vmatpush1.msra.mxu0 0.0
    %753 = vmatprep.subr.mxu0 0.0
    %754 = vmatpush1.msra.mxu0 0.0
    %755 = vmatprep.mubr.f32.mxu0 0.0
    %756 = vmatmul.mubr.f32.gmra.mrb[0].mxu0 %v644
    %v757 = vpop.f32.mrb[0].mxu0
    %v758 = vadd.f32 0.0, %v757
    %v759 = vpop.f32.mrb[0].mxu0
    %760 = vmatprep.mubr.f32.mxu0 0.0
    %761 = vmatmul.mubr.f32.gmra.mrb[0].mxu0 %v647
    %v762 = vpop.f32.mrb[0].mxu0
    %v763 = vadd.f32 0.0, %v762
    %v764 = vpop.f32.mrb[0].mxu0
    %765 = vmatprep.mubr.f32.mxu0 0.0
    %766 = vmatmul.mubr.f32.gmra.mrb[0].mxu0 %v650
    %v767 = vpop.f32.mrb[0].mxu0
    %v768 = vadd.f32 0.0, %v767
    %v769 = vpop.f32.mrb[0].mxu0
    %770 = vmatprep.mubr.f32.mxu0 0.0
    %771 = vmatmul.mubr.f32.gmra.mrb[0].mxu0 %v653
    %v772 = vpop.f32.mrb[0].mxu0
    %v773 = vadd.f32 0.0, %v772
    %v774 = vpop.f32.mrb[0].mxu0
    %775 = vmatprep.mubr.f32.mxu0 0.0
    %776 = vmatmul.mubr.f32.gmra.mrb[0].mxu0 %v656
    %v777 = vpop.f32.mrb[0].mxu0
    %v778 = vadd.f32 0.0, %v777
    %v779 = vpop.f32.mrb[0].mxu0
    %780 = vmatprep.mubr.f32.mxu0 0.0
    %781 = vmatmul.mubr.f32.gmra.mrb[0].mxu0 %v659
    %v782 = vpop.f32.mrb[0].mxu0
    %v783 = vadd.f32 0.0, %v782
    %v784 = vpop.f32.mrb[0].mxu0
    %785 = vmatprep.mubr.f32.mxu0 0.0
    %786 = vmatmul.mubr.f32.gmra.mrb[0].mxu0 %v662
    %v787 = vpop.f32.mrb[0].mxu0
    %v788 = vadd.f32 0.0, %v787
    %v789 = vpop.f32.mrb[0].mxu0
    %790 = vmatprep.mubr.f32.mxu0 0.0
    %791 = vmatmul.mubr.f32.gmra.mrb[0].mxu0 %v665
    %v792 = vpop.f32.mrb[0].mxu0
    %v793 = vadd.f32 0.0, %v792
    %v794 = vpop.f32.mrb[0].mxu0
    %795 = vmatprep.mubr.f32.mxu0 0.0
    %796 = vmatmul.mubr.f32.gmra.mrb[0].mxu0 %v668
    %v797 = vpop.f32.mrb[0].mxu0
    %v798 = vadd.f32 0.0, %v797
    %v799 = vpop.f32.mrb[0].mxu0
    %800 = vmatprep.mubr.f32.mxu0 0.0
    %801 = vmatmul.mubr.f32.gmra.mrb[0].mxu0 %v671
    %v802 = vpop.f32.mrb[0].mxu0
    %v803 = vadd.f32 0.0, %v802
    %v804 = vpop.f32.mrb[0].mxu0
    %805 = vmatprep.mubr.f32.mxu0 0.0
    %806 = vmatmul.mubr.f32.gmra.mrb[0].mxu0 %v674
    %v807 = vpop.f32.mrb[0].mxu0
    %v808 = vadd.f32 0.0, %v807
    %v809 = vpop.f32.mrb[0].mxu0
    %810 = vmatprep.mubr.f32.mxu0 0.0
    %811 = vmatmul.mubr.f32.gmra.mrb[0].mxu0 %v677
    %v812 = vpop.f32.mrb[0].mxu0
    %v813 = vadd.f32 0.0, %v812
    %v814 = vpop.f32.mrb[0].mxu0
    %815 = vmatprep.mubr.f32.mxu0 0.0
    %816 = vmatmul.mubr.f32.gmra.mrb[0].mxu0 %v680
    %v817 = vpop.f32.mrb[0].mxu0
    %v818 = vadd.f32 0.0, %v817
    %v819 = vpop.f32.mrb[0].mxu0
    %820 = vmatprep.mubr.f32.mxu0 0.0
    %821 = vmatmul.mubr.f32.gmra.mrb[0].mxu0 %v683
    %v822 = vpop.f32.mrb[0].mxu0
    %v823 = vadd.f32 0.0, %v822
    %v824 = vpop.f32.mrb[0].mxu0
    %825 = vmatprep.mubr.f32.mxu0 0.0
    %826 = vmatmul.mubr.f32.gmra.mrb[0].mxu0 %v686
    %v827 = vpop.f32.mrb[0].mxu0
    %v828 = vadd.f32 0.0, %v827
    %v829 = vpop.f32.mrb[0].mxu0
    %830 = vmatprep.mubr.f32.mxu0 0.0
    %831 = vmatmul.mubr.f32.gmra.mrb[0].mxu0 %v689
    %v832 = vpop.f32.mrb[0].mxu0
    %v833 = vadd.f32 0.0, %v832
    %v834 = vpop.f32.mrb[0].mxu0
    %835 = vdwg.mxu0
    %v837 = vsel %vm242, %v595, 0
    %v840 = vsel %vm242, %v596, 0
    %v843 = vsel %vm242, %v597, 0
    %v846 = vsel %vm242, %v598, 0
    %v849 = vsel %vm242, %v599, 0
    %v852 = vsel %vm242, %v600, 0
    %v855 = vsel %vm242, %v601, 0
    %v858 = vsel %vm242, %v602, 0
    %v861 = vsel %vm242, %v603, 0
    %v864 = vsel %vm242, %v604, 0
    %v867 = vsel %vm242, %v605, 0
    %v870 = vsel %vm242, %v606, 0
    %v873 = vsel %vm242, %v607, 0
    %v876 = vsel %vm242, %v608, 0
    %v879 = vsel %vm242, %v609, 0
    %v882 = vsel %vm242, %v610, 0
    %884 = vmatprep.subr.mxu0 0.0
    %885 = vmatpush1.msra.mxu0 %v627
    %886 = vmatprep.subr.mxu0 0.0
    %887 = vmatpush1.msra.mxu0 %v628
    %888 = vmatprep.subr.mxu0 0.0
    %889 = vmatpush1.msra.mxu0 %v629
    %890 = vmatprep.subr.mxu0 0.0
    %891 = vmatpush1.msra.mxu0 %v630
    %892 = vmatprep.subr.mxu0 0.0
    %893 = vmatpush1.msra.mxu0 %v631
    %894 = vmatprep.subr.mxu0 0.0
    %895 = vmatpush1.msra.mxu0 %v632
    %896 = vmatprep.subr.mxu0 0.0
    %897 = vmatpush1.msra.mxu0 %v633
    %898 = vmatprep.subr.mxu0 0.0
    %899 = vmatpush1.msra.mxu0 %v634
    %900 = vmatprep.subr.mxu0 0.0
    %901 = vmatpush1.msra.mxu0 0.0
    %902 = vmatprep.subr.mxu0 0.0
    %903 = vmatpush1.msra.mxu0 0.0
    %904 = vmatprep.subr.mxu0 0.0
    %905 = vmatpush1.msra.mxu0 0.0
    %906 = vmatprep.subr.mxu0 0.0
    %907 = vmatpush1.msra.mxu0 0.0
    %908 = vmatprep.subr.mxu0 0.0
    %909 = vmatpush1.msra.mxu0 0.0
    %910 = vmatprep.subr.mxu0 0.0
    %911 = vmatpush1.msra.mxu0 0.0
    %912 = vmatprep.subr.mxu0 0.0
    %913 = vmatpush1.msra.mxu0 0.0
    %914 = vmatprep.subr.mxu0 0.0
    %915 = vmatpush1.msra.mxu0 0.0
    %916 = vmatprep.subr.mxu0 0.0
    %917 = vmatpush1.msra.mxu0 0.0
    %918 = vmatprep.subr.mxu0 0.0
    %919 = vmatpush1.msra.mxu0 0.0
    %920 = vmatprep.subr.mxu0 0.0
    %921 = vmatpush1.msra.mxu0 0.0
    %922 = vmatprep.subr.mxu0 0.0
    %923 = vmatpush1.msra.mxu0 0.0
    %924 = vmatprep.subr.mxu0 0.0
    %925 = vmatpush1.msra.mxu0 0.0
    %926 = vmatprep.subr.mxu0 0.0
    %927 = vmatpush1.msra.mxu0 0.0
    %928 = vmatprep.subr.mxu0 0.0
    %929 = vmatpush1.msra.mxu0 0.0
    %930 = vmatprep.subr.mxu0 0.0
    %931 = vmatpush1.msra.mxu0 0.0
    %932 = vmatprep.subr.mxu0 0.0
    %933 = vmatpush1.msra.mxu0 0.0
    %934 = vmatprep.subr.mxu0 0.0
    %935 = vmatpush1.msra.mxu0 0.0
    %936 = vmatprep.subr.mxu0 0.0
    %937 = vmatpush1.msra.mxu0 0.0
    %938 = vmatprep.subr.mxu0 0.0
    %939 = vmatpush1.msra.mxu0 0.0
    %940 = vmatprep.subr.mxu0 0.0
    %941 = vmatpush1.msra.mxu0 0.0
    %942 = vmatprep.subr.mxu0 0.0
    %943 = vmatpush1.msra.mxu0 0.0
    %944 = vmatprep.subr.mxu0 0.0
    %945 = vmatpush1.msra.mxu0 0.0
    %946 = vmatprep.subr.mxu0 0.0
    %947 = vmatpush1.msra.mxu0 0.0
    %948 = vmatprep.mubr.f32.mxu0 0.0
    %949 = vmatmul.mubr.f32.gmra.mrb[0].mxu0 %v837
    %v950 = vpop.f32.mrb[0].mxu0
    %v951 = vadd.f32 %v758, %v950
    %v952 = vpop.f32.mrb[0].mxu0
    %953 = vmatprep.mubr.f32.mxu0 0.0
    %954 = vmatmul.mubr.f32.gmra.mrb[0].mxu0 %v840
    %v955 = vpop.f32.mrb[0].mxu0
    %v956 = vadd.f32 %v763, %v955
    %v957 = vpop.f32.mrb[0].mxu0
    %958 = vmatprep.mubr.f32.mxu0 0.0
    %959 = vmatmul.mubr.f32.gmra.mrb[0].mxu0 %v843
    %v960 = vpop.f32.mrb[0].mxu0
    %v961 = vadd.f32 %v768, %v960
    %v962 = vpop.f32.mrb[0].mxu0
    %963 = vmatprep.mubr.f32.mxu0 0.0
    %964 = vmatmul.mubr.f32.gmra.mrb[0].mxu0 %v846
    %v965 = vpop.f32.mrb[0].mxu0
    %v966 = vadd.f32 %v773, %v965
    %v967 = vpop.f32.mrb[0].mxu0
    %968 = vmatprep.mubr.f32.mxu0 0.0
    %969 = vmatmul.mubr.f32.gmra.mrb[0].mxu0 %v849
    %v970 = vpop.f32.mrb[0].mxu0
    %v971 = vadd.f32 %v778, %v970
    %v972 = vpop.f32.mrb[0].mxu0
    %973 = vmatprep.mubr.f32.mxu0 0.0
    %974 = vmatmul.mubr.f32.gmra.mrb[0].mxu0 %v852
    %v975 = vpop.f32.mrb[0].mxu0
    %v976 = vadd.f32 %v783, %v975
    %v977 = vpop.f32.mrb[0].mxu0
    %978 = vmatprep.mubr.f32.mxu0 0.0
    %979 = vmatmul.mubr.f32.gmra.mrb[0].mxu0 %v855
    %v980 = vpop.f32.mrb[0].mxu0
    %v981 = vadd.f32 %v788, %v980
    %v982 = vpop.f32.mrb[0].mxu0
    %983 = vmatprep.mubr.f32.mxu0 0.0
    %984 = vmatmul.mubr.f32.gmra.mrb[0].mxu0 %v858
    %v985 = vpop.f32.mrb[0].mxu0
    %v986 = vadd.f32 %v793, %v985
    %v987 = vpop.f32.mrb[0].mxu0
    %988 = vmatprep.mubr.f32.mxu0 0.0
    %989 = vmatmul.mubr.f32.gmra.mrb[0].mxu0 %v861
    %v990 = vpop.f32.mrb[0].mxu0
    %v991 = vadd.f32 %v798, %v990
    %v992 = vpop.f32.mrb[0].mxu0
    %993 = vmatprep.mubr.f32.mxu0 0.0
    %994 = vmatmul.mubr.f32.gmra.mrb[0].mxu0 %v864
    %v995 = vpop.f32.mrb[0].mxu0
    %v996 = vadd.f32 %v803, %v995
    %v997 = vpop.f32.mrb[0].mxu0
    %998 = vmatprep.mubr.f32.mxu0 0.0
    %999 = vmatmul.mubr.f32.gmra.mrb[0].mxu0 %v867
    %v1000 = vpop.f32.mrb[0].mxu0
    %v1001 = vadd.f32 %v808, %v1000
    %v1002 = vpop.f32.mrb[0].mxu0
    %1003 = vmatprep.mubr.f32.mxu0 0.0
    %1004 = vmatmul.mubr.f32.gmra.mrb[0].mxu0 %v870
    %v1005 = vpop.f32.mrb[0].mxu0
    %v1006 = vadd.f32 %v813, %v1005
    %v1007 = vpop.f32.mrb[0].mxu0
    %1008 = vmatprep.mubr.f32.mxu0 0.0
    %1009 = vmatmul.mubr.f32.gmra.mrb[0].mxu0 %v873
    %v1010 = vpop.f32.mrb[0].mxu0
    %v1011 = vadd.f32 %v818, %v1010
    %v1012 = vpop.f32.mrb[0].mxu0
    %1013 = vmatprep.mubr.f32.mxu0 0.0
    %1014 = vmatmul.mubr.f32.gmra.mrb[0].mxu0 %v876
    %v1015 = vpop.f32.mrb[0].mxu0
    %v1016 = vadd.f32 %v823, %v1015
    %v1017 = vpop.f32.mrb[0].mxu0
    %1018 = vmatprep.mubr.f32.mxu0 0.0
    %1019 = vmatmul.mubr.f32.gmra.mrb[0].mxu0 %v879
    %v1020 = vpop.f32.mrb[0].mxu0
    %v1021 = vadd.f32 %v828, %v1020
    %v1022 = vpop.f32.mrb[0].mxu0
    %1023 = vmatprep.mubr.f32.mxu0 0.0
    %1024 = vmatmul.mubr.f32.gmra.mrb[0].mxu0 %v882
    %v1025 = vpop.f32.mrb[0].mxu0
    %v1026 = vadd.f32 %v833, %v1025
    %v1027 = vpop.f32.mrb[0].mxu0
    %1028 = vdwg.mxu0
    %v1029 = vld [vmem:[%s4] sm:$0x1]
    %v1031 = vlaneseq
    %v1032 = vshrl.u32 %v1031, 7
    %v1033 = vsub.s32 0, %v1032
    %v1034 = vrot.slane %v1029, %v1033
    %v1036 = vadd.f32 %v951, %v1034
    %v1037 = vadd.f32 %v956, %v1034
    %v1038 = vadd.f32 %v961, %v1034
    %v1039 = vadd.f32 %v966, %v1034
    %v1040 = vadd.f32 %v971, %v1034
    %v1041 = vadd.f32 %v976, %v1034
    %v1042 = vadd.f32 %v981, %v1034
    %v1043 = vadd.f32 %v986, %v1034
    %v1044 = vadd.f32 %v991, %v1034
    %v1045 = vadd.f32 %v996, %v1034
    %v1046 = vadd.f32 %v1001, %v1034
    %v1047 = vadd.f32 %v1006, %v1034
    %v1048 = vadd.f32 %v1011, %v1034
    %v1049 = vadd.f32 %v1016, %v1034
    %v1050 = vadd.f32 %v1021, %v1034
    %v1051 = vadd.f32 %v1026, %v1034
    %1052 = vst [vmem:[#allocation4] sm:$0xff] %v1036
    %1053 = vst [vmem:[#allocation4 + $0x8] sm:$0xff] %v1037
    %1054 = vst [vmem:[#allocation4 + $0x10] sm:$0xff] %v1038
    %1055 = vst [vmem:[#allocation4 + $0x18] sm:$0xff] %v1039
    %1056 = vst [vmem:[#allocation4 + $0x20] sm:$0xff] %v1040
    %1057 = vst [vmem:[#allocation4 + $0x28] sm:$0xff] %v1041
    %1058 = vst [vmem:[#allocation4 + $0x30] sm:$0xff] %v1042
    %1059 = vst [vmem:[#allocation4 + $0x38] sm:$0xff] %v1043
    %1060 = vst [vmem:[#allocation4 + $0x40] sm:$0xff] %v1044
    %1061 = vst [vmem:[#allocation4 + $0x48] sm:$0xff] %v1045
    %1062 = vst [vmem:[#allocation4 + $0x50] sm:$0xff] %v1046
    %1063 = vst [vmem:[#allocation4 + $0x58] sm:$0xff] %v1047
    %1064 = vst [vmem:[#allocation4 + $0x60] sm:$0xff] %v1048
    %1065 = vst [vmem:[#allocation4 + $0x68] sm:$0xff] %v1049
    %1066 = vst [vmem:[#allocation4 + $0x70] sm:$0xff] %v1050
    %1067 = vst [vmem:[#allocation4 + $0x78] sm:$0xff] %v1051
    // Predicated region
    $region98: #{patch_merging.1} parent=1 // pred_check
      _
    $region99: #{patch_merging.1} parent=1 // pred_check_branch
      %1069 = sbr.rel (0) target = $region101
    $region100: #{patch_merging.1} parent=1 // pred_region
      %s1071 = ssub.s32 2048, 2048
      %1072 = vsyncadd [#allocation5], %s1071
      %s1073 = sshll.u32 [#allocation4], 4
      %s1074 = int_to_ptr.vmem [resolvable:$true] %s1073
      %1079 = dma.vmem_to_hbm [thread:$0]  %s1074, 2048, %s5, [#allocation5], 128, 128, 8
    $region101: #{patch_merging.1} parent=1 // pred_fallthru
      _
    // Predicated region
    $region102: #{patch_merging.1} parent=1 // pred_check
      _
    $region103: #{patch_merging.1} parent=1 // pred_check_branch
      %1081 = sbr.rel (0) target = $region105
    $region104: #{patch_merging.1} parent=1 // pred_region
      %1082 = dma.done [#allocation5], 2048
    $region105: #{patch_merging.1} parent=1 // pred_fallthru
      _
    %1083 = vsyncpa [#allocation5], 1

</llo_original>
